<compile_context>
chip_gen: v5e
topology: v5e:2x2
jax: 0.10.0
libtpu: 0.0.40
codegen_flags: <defaults>
</compile_context>

<pallas_src>
import functools

import jax
import jax.numpy as jnp
from jax.experimental import pallas as pl
from jax.experimental.pallas import tpu as pltpu

_LANE = 128   # vreg lane width: hidden feature axes padded to multiples of this


def _round_up(x, m):
    return pl.cdiv(x, m) * m


def _vmem_capacity_bytes():
    try:
        return int(pltpu.get_tpu_info().vmem_capacity_bytes)
    except Exception:
        return 64 * 1024 * 1024   # conservative (v7x per-TensorCore physical)


def _mlp_body(x, w1_ref, b1_ref, w2_ref, b2_ref, w3_ref, b3_ref, o_ref, cdt):
    """Shared 3-layer MLP body; x is already resonance-modulated (f32)."""
    h1 = jnp.dot(x.astype(cdt), w1_ref[...],
                 preferred_element_type=jnp.float32) + b1_ref[...]
    h1 = jnp.maximum(h1, 0.0)
    # Dropout(0.2): identity in eval mode (see TODO at top of file).
    h2 = jnp.dot(h1.astype(cdt), w2_ref[...],
                 preferred_element_type=jnp.float32) + b2_ref[...]
    h2 = jnp.maximum(h2, 0.0)
    out = jnp.dot(h2.astype(cdt), w3_ref[...],
                  preferred_element_type=jnp.float32) + b3_ref[...]
    o_ref[...] = out.astype(o_ref.dtype)


def _drl_kernel_pat(x_ref, pat_ref, w1_ref, b1_ref, w2_ref, b2_ref,
                    w3_ref, b3_ref, o_ref, *, cdt):
    # Elementwise modulation in the activation dtype (f32); pat_ref is either
    # (tm, input) streamed or (1, input) resident (broadcasts over rows).
    _mlp_body(x_ref[...] * pat_ref[...],
              w1_ref, b1_ref, w2_ref, b2_ref, w3_ref, b3_ref, o_ref, cdt)


def _drl_kernel_nopat(x_ref, w1_ref, b1_ref, w2_ref, b2_ref,
                      w3_ref, b3_ref, o_ref, *, cdt):
    _mlp_body(x_ref[...],
              w1_ref, b1_ref, w2_ref, b2_ref, w3_ref, b3_ref, o_ref, cdt)


def init_drl_params(key, input_size, hidden_size, output_size, dtype=jnp.float32):
    """PyTorch-style uniform fan-in init; weights stored as (in, out)."""
    def linear(k, fan_in, fan_out):
        kw, kb = jax.random.split(k)
        bound = 1.0 / float(fan_in) ** 0.5
        w = jax.random.uniform(kw, (fan_in, fan_out), dtype, -bound, bound)
        b = jax.random.uniform(kb, (fan_out,), dtype, -bound, bound)
        return w, b

    k1, k2, k3 = jax.random.split(key, 3)
    w1, b1 = linear(k1, input_size, hidden_size)
    w2, b2 = linear(k2, hidden_size, hidden_size // 2)
    w3, b3 = linear(k3, hidden_size // 2, output_size)
    return (w1, b1, w2, b2, w3, b3)


def prepare_drl_params(params, *, compute_dtype=jnp.float32):
    """Pad/cast weights ONCE (reused across forward calls).

    Hidden axes are zero-padded to multiples of 128 lanes (padded units have
    zero weight + zero bias, so ReLU(0)=0 and the math stays exact).  The
    output axis is padded only when output_size is a large fraction of the
    padded width; otherwise the kernel writes the true-width output.
    """
    w1, b1, w2, b2, w3, b3 = params
    input_size = int(w1.shape[0])
    hidden1, hidden2, output_size = int(w1.shape[1]), int(w2.shape[1]), int(w3.shape[1])
    cdt = jnp.dtype(compute_dtype)

    h1_p = _round_up(hidden1, _LANE)
    h2_p = _round_up(hidden2, _LANE)
    out_p = _round_up(output_size, _LANE)
    pad_out = (output_size == out_p) or (4 * output_size >= 3 * out_p)
    out_dim = out_p if pad_out else output_size

    def pad2(a, rows, cols, dtype):
        a = jnp.asarray(a, dtype)
        if a.ndim == 1:
            a = a.reshape(1, -1)
        return jnp.pad(a, ((0, rows - a.shape[0]), (0, cols - a.shape[1])))

    return dict(
        input_size=input_size, output_size=output_size, out_dim=out_dim,
        compute_dtype=cdt,
        w1=pad2(w1, input_size, h1_p, cdt),
        b1=pad2(b1, 1, h1_p, jnp.float32),   # biases added after f32 accumulation
        w2=pad2(w2, h1_p, h2_p, cdt),
        b2=pad2(b2, 1, h2_p, jnp.float32),
        w3=pad2(w3, h2_p, out_dim, cdt),
        b3=pad2(b3, 1, out_dim, jnp.float32),
    )


def drl_network_forward(x, params, resonance_pattern=None, *,
                        compute_dtype=jnp.float32, block_m=256):
    """Pallas-fused DRLNetwork forward.

    `params` may be the raw 6-tuple or the dict returned by
    prepare_drl_params() (preferred: padding/casting then happens only once).
    """
    prepared = params if isinstance(params, dict) else prepare_drl_params(
        params, compute_dtype=compute_dtype)

    cdt = prepared["compute_dtype"]
    input_size = prepared["input_size"]
    output_size = prepared["output_size"]
    out_dim = prepared["out_dim"]
    w1p, b1p, w2p, b2p, w3p, b3p = (prepared[k] for k in ("w1", "b1", "w2", "b2", "w3", "b3"))
    h1_p, h2_p = w1p.shape[1], w2p.shape[1]

    batch = x.shape[0]
    assert x.shape[1] == input_size, "x feature dim does not match params"
    out_dtype = x.dtype

    # Batch tile: dtype-aware sublane rounding; ensure >=2 grid steps when the
    # batch allows so v7x's two TensorCores both get work (harmless on v5e/v6e).
    sublane = 16 if (cdt.itemsize < 4 or jnp.dtype(x.dtype).itemsize < 4) else 8
    tm = min(block_m, _round_up(batch, sublane))
    if batch >= 2 * sublane:
        tm = min(tm, _round_up(pl.cdiv(batch, 2), sublane))
    tm = _round_up(tm, sublane)
    batch_p = _round_up(batch, tm)
    grid_m = batch_p // tm

    # Only the batch axis is padded; the lane axis stays at its true width.
    xp = x if batch_p == batch else jnp.pad(x, ((0, batch_p - batch), (0, 0)))

    pat_mode = "none"
    pat = None
    if resonance_pattern is not None:
        pat = jnp.asarray(resonance_pattern, x.dtype)
        if pat.ndim <= 1 or (pat.ndim == 2 and pat.shape[0] == 1):
            # Per-feature (or scalar) pattern: keep it VMEM-resident.
            pat = pat.reshape(1, -1)
            if pat.shape[1] == 1:
                pat = jnp.broadcast_to(pat, (1, input_size))
            pat_mode = "resident"
        else:
            # Per-sample pattern: stream alongside x (batch padding only).
            pat = jnp.broadcast_to(pat, x.shape)
            if batch_p != batch:
                pat = jnp.pad(pat, ((0, batch_p - batch), (0, 0)))
            pat_mode = "streamed"

    weight_ops = (w1p, b1p, w2p, b2p, w3p, b3p)

    def _invoke(single_buffer_resident):
        res_kwargs = ({"pipeline_mode": pl.Buffered(1)}
                      if single_buffer_resident else {})

        def resident_spec(shape):
            nd = len(shape)
            return pl.BlockSpec(shape, lambda i, _nd=nd: (0,) * _nd, **res_kwargs)

        x_spec = pl.BlockSpec((tm, input_size), lambda i: (i, 0))
        out_spec = pl.BlockSpec((tm, out_dim), lambda i: (i, 0))
        weight_specs = [resident_spec(op.shape) for op in weight_ops]

        if pat_mode == "none":
            kernel = functools.partial(_drl_kernel_nopat, cdt=cdt)
            operands = (xp,) + weight_ops
            in_specs = [x_spec] + weight_specs
        elif pat_mode == "resident":
            kernel = functools.partial(_drl_kernel_pat, cdt=cdt)
            operands = (xp, pat) + weight_ops
            in_specs = [x_spec, resident_spec(pat.shape)] + weight_specs
        else:  # streamed per-sample pattern
            kernel = functools.partial(_drl_kernel_pat, cdt=cdt)
            pat_spec = pl.BlockSpec((tm, input_size), lambda i: (i, 0))
            operands = (xp, pat) + weight_ops
            in_specs = [x_spec, pat_spec] + weight_specs

        # VMEM budget: resident operands are single-buffered when requested;
        # streamed tiles are double-buffered by the auto-pipeline.
        resident_buf = 1 if single_buffer_resident else 2
        resident_bytes = sum(int(op.size) * op.dtype.itemsize for op in weight_ops)
        if pat_mode == "resident":
            resident_bytes += int(pat.size) * pat.dtype.itemsize
        n_stream_in = 2 if pat_mode == "streamed" else 1
        stream_bytes = 2 * tm * (n_stream_in * input_size * x.dtype.itemsize
                                 + out_dim * jnp.dtype(out_dtype).itemsize)
        act_bytes = 4 * tm * (h1_p + h2_p)          # f32 intermediates
        vmem_est = resident_buf * resident_bytes + stream_bytes + act_bytes

        compiler_kwargs = dict(dimension_semantics=("parallel",))
        if vmem_est > 16 * 1024 * 1024:             # v5e scoped-VMEM default
            cap = int(0.85 * _vmem_capacity_bytes())
            want = max(int(1.25 * vmem_est), 32 * 1024 * 1024)
            compiler_kwargs["vmem_limit_bytes"] = min(want, cap)

        flops = 2 * batch_p * (input_size * h1_p + h1_p * h2_p + h2_p * out_dim)
        bytes_accessed = (sum(int(op.size) * op.dtype.itemsize for op in operands)
                          + batch_p * out_dim * jnp.dtype(out_dtype).itemsize)

        return pl.pallas_call(
            kernel,
            out_shape=jax.ShapeDtypeStruct((batch_p, out_dim), out_dtype),
            grid=(grid_m,),
            in_specs=in_specs,
            out_specs=out_spec,
            compiler_params=pltpu.CompilerParams(**compiler_kwargs),
            cost_estimate=pl.CostEstimate(flops=int(flops), transcendentals=0,
                                          bytes_accessed=int(bytes_accessed)),
        )(*operands)

    try:
        out_padded = _invoke(True)
    except Exception:
        # pipeline_mode=pl.Buffered(1) unsupported on this JAX build -> fall
        # back to default double-buffered resident operands (correctness same).
        out_padded = _invoke(False)

    out = out_padded
    if batch_p != batch:
        out = out[:batch]
    if out_dim != output_size:
        out = out[:, :output_size]
    return out


if __name__ == "__main__":
    batch, input_size, hidden_size, output_size = 8, 32, 32, 8

    key = jax.random.PRNGKey(0)
    k_params, k_x, k_pat = jax.random.split(key, 3)

    params = init_drl_params(k_params, input_size, hidden_size, output_size)
    w1, b1, w2, b2, w3, b3 = params
    x = jax.random.normal(k_x, (batch, input_size), jnp.float32)
    pattern = jax.random.normal(k_pat, (batch, input_size), jnp.float32)
    feat_pattern = jax.random.normal(k_pat, (input_size,), jnp.float32)

    # Weight padding / casting happens once and is reused across calls.
    prepared_f32 = prepare_drl_params(params, compute_dtype=jnp.float32)
    prepared_bf16 = prepare_drl_params(params, compute_dtype=jnp.bfloat16)

    def ref_forward(xv, patv, dt):
        xm = xv if patv is None else xv * patv          # elementwise in f32
        xm = xm.astype(dt)
        h = jnp.maximum(jnp.dot(xm, w1.astype(dt),
                                preferred_element_type=jnp.float32) + b1, 0.0)
        h = jnp.maximum(jnp.dot(h.astype(dt), w2.astype(dt),
                                preferred_element_type=jnp.float32) + b2, 0.0)
        return jnp.dot(h.astype(dt), w3.astype(dt),
                       preferred_element_type=jnp.float32) + b3

    # f32, per-sample pattern (streamed).
    out = jax.block_until_ready(drl_network_forward(x, prepared_f32, pattern))
    assert out.shape == (batch, output_size)
    assert jnp.allclose(out, ref_forward(x, pattern, jnp.float32),
                        atol=1e-5, rtol=1e-5), "f32 per-sample pattern mismatch"

    # f32, resonance_pattern=None (dedicated kernel, no pattern DMA at all).
    out_np = jax.block_until_ready(drl_network_forward(x, prepared_f32, None))
    assert jnp.allclose(out_np, ref_forward(x, None, jnp.float32),
                        atol=1e-5, rtol=1e-5), "f32 no-pattern mismatch"

    # f32, per-feature pattern: kept VMEM-resident and broadcast in-kernel.
    out_fp = jax.block_until_ready(drl_network_forward(x, prepared_f32, feat_pattern))
    assert jnp.allclose(out_fp, ref_forward(x, feat_pattern[None, :], jnp.float32),
                        atol=1e-5, rtol=1e-5), "f32 per-feature pattern mismatch"

    # bf16 MXU operands (f32 accumulation, modulation kept in f32).
    out_bf = jax.block_until_ready(drl_network_forward(x, prepared_bf16, pattern))
    assert jnp.allclose(out_bf, ref_forward(x, pattern, jnp.bfloat16),
                        atol=2e-2, rtol=2e-2), "bf16 path mismatch"

    # Multi-tile batch grid: resident weights reused across grid iterations.
    xb = jax.random.normal(k_x, (64, input_size), jnp.float32)
    pb = jax.random.normal(k_pat, (64, input_size), jnp.float32)
    out_b = jax.block_until_ready(drl_network_forward(xb, prepared_f32, pb, block_m=16))
    assert out_b.shape == (64, output_size)
    assert jnp.allclose(out_b, ref_forward(xb, pb, jnp.float32),
                        atol=1e-5, rtol=1e-5), "batch-tiled path mismatch"

    print("KERNEL_OK")
</pallas_src>

<mosaic_0001>
module attributes {stable_mosaic.version = 11 : i64} {
  func.func @_drl_kernel_pat(%arg0: i32, %arg1: memref<8x32xf32, #tpu.memory_space<vmem>>, %arg2: memref<8x32xf32, #tpu.memory_space<vmem>>, %arg3: memref<32x128xf32, #tpu.memory_space<vmem>>, %arg4: memref<1x128xf32, #tpu.memory_space<vmem>>, %arg5: memref<128x128xf32, #tpu.memory_space<vmem>>, %arg6: memref<1x128xf32, #tpu.memory_space<vmem>>, %arg7: memref<128x8xf32, #tpu.memory_space<vmem>>, %arg8: memref<1x8xf32, #tpu.memory_space<vmem>>, %arg9: memref<8x8xf32, #tpu.memory_space<vmem>>) attributes {dimension_semantics = [#tpu.dimension_semantics<parallel>], iteration_bounds = array<i64: 1>, scalar_prefetch = 0 : i64, scratch_operands = 0 : i64, tpu.core_type = #tpu.core_type<tc>, window_params = [{transform_indices = @transform_0, window_bounds = array<i64: 8, 32>}, {transform_indices = @transform_1, window_bounds = array<i64: 8, 32>}, {pipeline_mode = #tpu.pipeline_mode<synchronous>, transform_indices = @transform_2, window_bounds = array<i64: 32, 128>}, {pipeline_mode = #tpu.pipeline_mode<synchronous>, transform_indices = @transform_3, window_bounds = array<i64: 1, 128>}, {pipeline_mode = #tpu.pipeline_mode<synchronous>, transform_indices = @transform_4, window_bounds = array<i64: 128, 128>}, {pipeline_mode = #tpu.pipeline_mode<synchronous>, transform_indices = @transform_5, window_bounds = array<i64: 1, 128>}, {pipeline_mode = #tpu.pipeline_mode<synchronous>, transform_indices = @transform_6, window_bounds = array<i64: 128, 8>}, {pipeline_mode = #tpu.pipeline_mode<synchronous>, transform_indices = @transform_7, window_bounds = array<i64: 1, 8>}, {transform_indices = @transform_8, window_bounds = array<i64: 8, 8>}]} {
    %c0 = arith.constant 0 : index
    %c0_0 = arith.constant 0 : index
    %0 = vector.load %arg1[%c0, %c0_0] : memref<8x32xf32, #tpu.memory_space<vmem>>, vector<8x32xf32>
    %c0_1 = arith.constant 0 : index
    %c0_2 = arith.constant 0 : index
    %1 = vector.load %arg2[%c0_1, %c0_2] : memref<8x32xf32, #tpu.memory_space<vmem>>, vector<8x32xf32>
    %2 = arith.mulf %0, %1 : vector<8x32xf32>
    %c0_3 = arith.constant 0 : index
    %c0_4 = arith.constant 0 : index
    %3 = vector.load %arg3[%c0_3, %c0_4] : memref<32x128xf32, #tpu.memory_space<vmem>>, vector<32x128xf32>
    %cst = arith.constant dense<0.000000e+00> : vector<8x128xf32>
    %4 = tpu.matmul %2, %3, %cst {dimension_numbers = #tpu.dot_dimension_numbers<[1], [0], [0], [1], [0, 0, 1, 1], [], []>} : vector<8x32xf32>, vector<32x128xf32>, vector<8x128xf32> -> vector<8x128xf32>
    %c0_5 = arith.constant 0 : index
    %c0_6 = arith.constant 0 : index
    %5 = vector.load %arg4[%c0_5, %c0_6] : memref<1x128xf32, #tpu.memory_space<vmem>>, vector<1x128xf32>
    %6 = vector.broadcast %5 : vector<1x128xf32> to vector<8x128xf32>
    %7 = arith.addf %4, %6 : vector<8x128xf32>
    %cst_7 = arith.constant 0.000000e+00 : f32
    %8 = vector.broadcast %cst_7 : f32 to vector<8x128xf32>
    %9 = arith.maximumf %7, %8 : vector<8x128xf32>
    %c0_8 = arith.constant 0 : index
    %c0_9 = arith.constant 0 : index
    %10 = vector.load %arg5[%c0_8, %c0_9] : memref<128x128xf32, #tpu.memory_space<vmem>>, vector<128x128xf32>
    %cst_10 = arith.constant dense<0.000000e+00> : vector<8x128xf32>
    %11 = tpu.matmul %9, %10, %cst_10 {dimension_numbers = #tpu.dot_dimension_numbers<[1], [0], [0], [1], [0, 0, 1, 1], [], []>} : vector<8x128xf32>, vector<128x128xf32>, vector<8x128xf32> -> vector<8x128xf32>
    %c0_11 = arith.constant 0 : index
    %c0_12 = arith.constant 0 : index
    %12 = vector.load %arg6[%c0_11, %c0_12] : memref<1x128xf32, #tpu.memory_space<vmem>>, vector<1x128xf32>
    %13 = vector.broadcast %12 : vector<1x128xf32> to vector<8x128xf32>
    %14 = arith.addf %11, %13 : vector<8x128xf32>
    %cst_13 = arith.constant 0.000000e+00 : f32
    %15 = vector.broadcast %cst_13 : f32 to vector<8x128xf32>
    %16 = arith.maximumf %14, %15 : vector<8x128xf32>
    %c0_14 = arith.constant 0 : index
    %c0_15 = arith.constant 0 : index
    %17 = vector.load %arg7[%c0_14, %c0_15] : memref<128x8xf32, #tpu.memory_space<vmem>>, vector<128x8xf32>
    %cst_16 = arith.constant dense<0.000000e+00> : vector<8x8xf32>
    %18 = tpu.matmul %16, %17, %cst_16 {dimension_numbers = #tpu.dot_dimension_numbers<[1], [0], [0], [1], [0, 0, 1, 1], [], []>} : vector<8x128xf32>, vector<128x8xf32>, vector<8x8xf32> -> vector<8x8xf32>
    %c0_17 = arith.constant 0 : index
    %c0_18 = arith.constant 0 : index
    %19 = vector.load %arg8[%c0_17, %c0_18] : memref<1x8xf32, #tpu.memory_space<vmem>>, vector<1x8xf32>
    %20 = vector.broadcast %19 : vector<1x8xf32> to vector<8x8xf32>
    %21 = arith.addf %18, %20 : vector<8x8xf32>
    %c0_19 = arith.constant 0 : index
    %c0_20 = arith.constant 0 : index
    %22 = vector.load %arg9[%c0_19, %c0_20] : memref<8x8xf32, #tpu.memory_space<vmem>>, vector<8x8xf32>
    tpu.vector_store %arg9[%c0_19, %c0_20], %21 {strides = array<i32>} : memref<8x8xf32, #tpu.memory_space<vmem>>, vector<8x8xf32>,
    return
  }
  func.func @transform_0(%arg0: i32) -> (i32, i32) {
    %c0_i32 = arith.constant 0 : i32
    %c0_i32_0 = arith.constant 0 : i32
    return %arg0, %c0_i32 : i32, i32
  }
  func.func @transform_1(%arg0: i32) -> (i32, i32) {
    %c0_i32 = arith.constant 0 : i32
    %c0_i32_0 = arith.constant 0 : i32
    return %arg0, %c0_i32 : i32, i32
  }
  func.func @transform_2(%arg0: i32) -> (i32, i32) {
    %c0_i32 = arith.constant 0 : i32
    %c0_i32_0 = arith.constant 0 : i32
    %c0_i32_1 = arith.constant 0 : i32
    return %c0_i32, %c0_i32_0 : i32, i32
  }
  func.func @transform_3(%arg0: i32) -> (i32, i32) {
    %c0_i32 = arith.constant 0 : i32
    %c0_i32_0 = arith.constant 0 : i32
    %c0_i32_1 = arith.constant 0 : i32
    return %c0_i32, %c0_i32_0 : i32, i32
  }
  func.func @transform_4(%arg0: i32) -> (i32, i32) {
    %c0_i32 = arith.constant 0 : i32
    %c0_i32_0 = arith.constant 0 : i32
    %c0_i32_1 = arith.constant 0 : i32
    return %c0_i32, %c0_i32_0 : i32, i32
  }
  func.func @transform_5(%arg0: i32) -> (i32, i32) {
    %c0_i32 = arith.constant 0 : i32
    %c0_i32_0 = arith.constant 0 : i32
    %c0_i32_1 = arith.constant 0 : i32
    return %c0_i32, %c0_i32_0 : i32, i32
  }
  func.func @transform_6(%arg0: i32) -> (i32, i32) {
    %c0_i32 = arith.constant 0 : i32
    %c0_i32_0 = arith.constant 0 : i32
    %c0_i32_1 = arith.constant 0 : i32
    return %c0_i32, %c0_i32_0 : i32, i32
  }
  func.func @transform_7(%arg0: i32) -> (i32, i32) {
    %c0_i32 = arith.constant 0 : i32
    %c0_i32_0 = arith.constant 0 : i32
    %c0_i32_1 = arith.constant 0 : i32
    return %c0_i32, %c0_i32_0 : i32, i32
  }
  func.func @transform_8(%arg0: i32) -> (i32, i32) {
    %c0_i32 = arith.constant 0 : i32
    %c0_i32_0 = arith.constant 0 : i32
    return %arg0, %c0_i32 : i32, i32
  }
}

module attributes {stable_mosaic.version = 11 : i64} {
  func.func @_drl_kernel_pat(%arg0: i32, %arg1: memref<8x32xf32, #tpu.memory_space<vmem>>, %arg2: memref<8x32xf32, #tpu.memory_space<vmem>>, %arg3: memref<32x128xf32, #tpu.memory_space<vmem>>, %arg4: memref<1x128xf32, #tpu.memory_space<vmem>>, %arg5: memref<128x128xf32, #tpu.memory_space<vmem>>, %arg6: memref<1x128xf32, #tpu.memory_space<vmem>>, %arg7: memref<128x8xf32, #tpu.memory_space<vmem>>, %arg8: memref<1x8xf32, #tpu.memory_space<vmem>>, %arg9: memref<8x8xf32, #tpu.memory_space<vmem>>) attributes {dimension_semantics = [#tpu.dimension_semantics<parallel>], iteration_bounds = array<i64: 1>, scalar_prefetch = 0 : i64, scratch_operands = 0 : i64, tpu.core_type = #tpu.core_type<tc>, window_params = [{transform_indices = @transform_0, window_bounds = array<i64: 8, 32>}, {transform_indices = @transform_1, window_bounds = array<i64: 8, 32>}, {pipeline_mode = #tpu.pipeline_mode<synchronous>, transform_indices = @transform_2, window_bounds = array<i64: 32, 128>}, {pipeline_mode = #tpu.pipeline_mode<synchronous>, transform_indices = @transform_3, window_bounds = array<i64: 1, 128>}, {pipeline_mode = #tpu.pipeline_mode<synchronous>, transform_indices = @transform_4, window_bounds = array<i64: 128, 128>}, {pipeline_mode = #tpu.pipeline_mode<synchronous>, transform_indices = @transform_5, window_bounds = array<i64: 1, 128>}, {pipeline_mode = #tpu.pipeline_mode<synchronous>, transform_indices = @transform_6, window_bounds = array<i64: 128, 8>}, {pipeline_mode = #tpu.pipeline_mode<synchronous>, transform_indices = @transform_7, window_bounds = array<i64: 1, 8>}, {transform_indices = @transform_8, window_bounds = array<i64: 8, 8>}]} {
    %c0 = arith.constant 0 : index
    %c0_0 = arith.constant 0 : index
    %0 = vector.load %arg1[%c0, %c0_0] : memref<8x32xf32, #tpu.memory_space<vmem>>, vector<8x32xf32>
    %c0_1 = arith.constant 0 : index
    %c0_2 = arith.constant 0 : index
    %1 = vector.load %arg2[%c0_1, %c0_2] : memref<8x32xf32, #tpu.memory_space<vmem>>, vector<8x32xf32>
    %2 = arith.mulf %0, %1 : vector<8x32xf32>
    %c0_3 = arith.constant 0 : index
    %c0_4 = arith.constant 0 : index
    %3 = vector.load %arg3[%c0_3, %c0_4] : memref<32x128xf32, #tpu.memory_space<vmem>>, vector<32x128xf32>
    %cst = arith.constant dense<0.000000e+00> : vector<8x128xf32>
    %4 = tpu.matmul %2, %3, %cst {dimension_numbers = #tpu.dot_dimension_numbers<[1], [0], [0], [1], [0, 0, 1, 1], [], []>} : vector<8x32xf32>, vector<32x128xf32>, vector<8x128xf32> -> vector<8x128xf32>
    %c0_5 = arith.constant 0 : index
    %c0_6 = arith.constant 0 : index
    %5 = vector.load %arg4[%c0_5, %c0_6] : memref<1x128xf32, #tpu.memory_space<vmem>>, vector<1x128xf32>
    %6 = vector.broadcast %5 : vector<1x128xf32> to vector<8x128xf32>
    %7 = arith.addf %4, %6 : vector<8x128xf32>
    %cst_7 = arith.constant 0.000000e+00 : f32
    %8 = vector.broadcast %cst_7 : f32 to vector<8x128xf32>
    %9 = arith.maximumf %7, %8 : vector<8x128xf32>
    %c0_8 = arith.constant 0 : index
    %c0_9 = arith.constant 0 : index
    %10 = vector.load %arg5[%c0_8, %c0_9] : memref<128x128xf32, #tpu.memory_space<vmem>>, vector<128x128xf32>
    %cst_10 = arith.constant dense<0.000000e+00> : vector<8x128xf32>
    %11 = tpu.matmul %9, %10, %cst_10 {dimension_numbers = #tpu.dot_dimension_numbers<[1], [0], [0], [1], [0, 0, 1, 1], [], []>} : vector<8x128xf32>, vector<128x128xf32>, vector<8x128xf32> -> vector<8x128xf32>
    %c0_11 = arith.constant 0 : index
    %c0_12 = arith.constant 0 : index
    %12 = vector.load %arg6[%c0_11, %c0_12] : memref<1x128xf32, #tpu.memory_space<vmem>>, vector<1x128xf32>
    %13 = vector.broadcast %12 : vector<1x128xf32> to vector<8x128xf32>
    %14 = arith.addf %11, %13 : vector<8x128xf32>
    %cst_13 = arith.constant 0.000000e+00 : f32
    %15 = vector.broadcast %cst_13 : f32 to vector<8x128xf32>
    %16 = arith.maximumf %14, %15 : vector<8x128xf32>
    %c0_14 = arith.constant 0 : index
    %c0_15 = arith.constant 0 : index
    %17 = vector.load %arg7[%c0_14, %c0_15] : memref<128x8xf32, #tpu.memory_space<vmem>>, vector<128x8xf32>
    %cst_16 = arith.constant dense<0.000000e+00> : vector<8x8xf32>
    %18 = tpu.matmul %16, %17, %cst_16 {dimension_numbers = #tpu.dot_dimension_numbers<[1], [0], [0], [1], [0, 0, 1, 1], [], []>} : vector<8x128xf32>, vector<128x8xf32>, vector<8x8xf32> -> vector<8x8xf32>
    %c0_17 = arith.constant 0 : index
    %c0_18 = arith.constant 0 : index
    %19 = vector.load %arg8[%c0_17, %c0_18] : memref<1x8xf32, #tpu.memory_space<vmem>>, vector<1x8xf32>
    %20 = vector.broadcast %19 : vector<1x8xf32> to vector<8x8xf32>
    %21 = arith.addf %18, %20 : vector<8x8xf32>
    %c0_19 = arith.constant 0 : index
    %c0_20 = arith.constant 0 : index
    %22 = vector.load %arg9[%c0_19, %c0_20] : memref<8x8xf32, #tpu.memory_space<vmem>>, vector<8x8xf32>
    tpu.vector_store %arg9[%c0_19, %c0_20], %21 {strides = array<i32>} : memref<8x8xf32, #tpu.memory_space<vmem>>, vector<8x8xf32>,
    return
  }
  func.func @transform_0(%arg0: i32) -> (i32, i32) {
    %c0_i32 = arith.constant 0 : i32
    %c0_i32_0 = arith.constant 0 : i32
    return %arg0, %c0_i32 : i32, i32
  }
  func.func @transform_1(%arg0: i32) -> (i32, i32) {
    %c0_i32 = arith.constant 0 : i32
    %c0_i32_0 = arith.constant 0 : i32
    return %arg0, %c0_i32 : i32, i32
  }
  func.func @transform_2(%arg0: i32) -> (i32, i32) {
    %c0_i32 = arith.constant 0 : i32
    %c0_i32_0 = arith.constant 0 : i32
    %c0_i32_1 = arith.constant 0 : i32
    return %c0_i32, %c0_i32_0 : i32, i32
  }
  func.func @transform_3(%arg0: i32) -> (i32, i32) {
    %c0_i32 = arith.constant 0 : i32
    %c0_i32_0 = arith.constant 0 : i32
    %c0_i32_1 = arith.constant 0 : i32
    return %c0_i32, %c0_i32_0 : i32, i32
  }
  func.func @transform_4(%arg0: i32) -> (i32, i32) {
    %c0_i32 = arith.constant 0 : i32
    %c0_i32_0 = arith.constant 0 : i32
    %c0_i32_1 = arith.constant 0 : i32
    return %c0_i32, %c0_i32_0 : i32, i32
  }
  func.func @transform_5(%arg0: i32) -> (i32, i32) {
    %c0_i32 = arith.constant 0 : i32
    %c0_i32_0 = arith.constant 0 : i32
    %c0_i32_1 = arith.constant 0 : i32
    return %c0_i32, %c0_i32_0 : i32, i32
  }
  func.func @transform_6(%arg0: i32) -> (i32, i32) {
    %c0_i32 = arith.constant 0 : i32
    %c0_i32_0 = arith.constant 0 : i32
    %c0_i32_1 = arith.constant 0 : i32
    return %c0_i32, %c0_i32_0 : i32, i32
  }
  func.func @transform_7(%arg0: i32) -> (i32, i32) {
    %c0_i32 = arith.constant 0 : i32
    %c0_i32_0 = arith.constant 0 : i32
    %c0_i32_1 = arith.constant 0 : i32
    return %c0_i32, %c0_i32_0 : i32, i32
  }
  func.func @transform_8(%arg0: i32) -> (i32, i32) {
    %c0_i32 = arith.constant 0 : i32
    %c0_i32_0 = arith.constant 0 : i32
    return %arg0, %c0_i32 : i32, i32
  }
}

</mosaic_0001>

<llo_original>
// kernel: tpu_custom_call.1
$region0: #{tpu_custom_call.1}
  #allocation0 [shape = 'u32[]', space=smem, size = 0x4, offset = 0x4, fixed_abs, tag = 'smem constant byte address 0x4 - core index']
  #allocation1 [shape = 'u32[72,128]{1,0:T(1,128)}', space=vmem, size = 0x9000, scoped, tag = 'internal scratch']
  %s0 = inlined_call_operand.vmem [shape: f32[8,32], index: 0, kind: input, shape index: {}]
  %s1 = inlined_call_operand.hbm [shape: f32[8,32], index: 1, kind: input, shape index: {}]
  %s2 = inlined_call_operand.hbm [shape: f32[32,128], index: 2, kind: input, shape index: {}]
  %s3 = inlined_call_operand.vmem [shape: f32[1,128], index: 3, kind: input, shape index: {}]
  %s4 = inlined_call_operand.vmem [shape: f32[128,128], index: 4, kind: input, shape index: {}]
  %s5 = inlined_call_operand.vmem [shape: f32[1,128], index: 5, kind: input, shape index: {}]
  %s6 = inlined_call_operand.vmem [shape: f32[128,8], index: 6, kind: input, shape index: {}]
  %s7 = inlined_call_operand.vmem [shape: f32[1,8], index: 7, kind: input, shape index: {}]
  %s8 = inlined_call_operand.hbm [shape: f32[8,8], index: 8, kind: output, shape index: {}]
  %s9 = sld [smem:[#allocation0]]
  $region50: #{tpu_custom_call.1} parent=0
    _
  %s11 = ssub.s32 1, %s9
  %s12 = scalar_select 0, %s11, %s9
  $region1: #{tpu_custom_call.1} parent=0
    #allocation2 [shape = 'u8[4096]{0}', space=vmem, size = 0x1000, scoped, tag = 'input window, operand 1, single buffered']
    #allocation3 [shape = 's32[1]{0}', space=sflag, size = 0x4, scoped, tag = 'scoped memory for tpu_custom_call.1']
    #allocation4 [shape = 's32[1]{0}', space=sflag, size = 0x4, scoped, tag = 'scoped memory for tpu_custom_call.1']
    #allocation5 [shape = 'u8[16384]{0}', space=vmem, size = 0x4000, scoped, tag = 'input window, operand 2, single buffered']
    #allocation6 [shape = 's32[1]{0}', space=sflag, size = 0x4, scoped, tag = 'scoped memory for tpu_custom_call.1']
    #allocation7 [shape = 'u8[4096]{0}', space=vmem, size = 0x1000, scoped, tag = 'output window, operand 0, single buffered']
    %13 = vsyncpa [#allocation3], 0
    %14 = vsyncpa [#allocation6], 0
    %15 = vsyncpa [#allocation4], 0
    // Predicated region
    $region2: #{tpu_custom_call.1} parent=1 // pred_check
      _
    $region3: #{tpu_custom_call.1} parent=1 // pred_check_branch
      %17 = sbr.rel (0) target = $region5
    $region4: #{tpu_custom_call.1} parent=1 // pred_region
      _
    $region5: #{tpu_custom_call.1} parent=1 // pred_fallthru
      _
    // Predicated region
    $region6: #{tpu_custom_call.1} parent=1 // pred_check
      _
    $region7: #{tpu_custom_call.1} parent=1 // pred_check_branch
      %19 = sbr.rel (0) target = $region9
    $region8: #{tpu_custom_call.1} parent=1 // pred_region
      %21 = vsyncadd [#allocation3], 0
      %s23 = sshll.u32 %s1, 4
      %s24 = int_to_ptr.hbm [resolvable:$true] %s23
      %s25 = sshll.u32 [#allocation2], 4
      %s26 = int_to_ptr.vmem [resolvable:$true] %s25
      %28 = dma.hbm_to_vmem [thread:$0]  %s24, 128, %s26, [#allocation3]
    $region9: #{tpu_custom_call.1} parent=1 // pred_fallthru
      _
    // Predicated region
    $region10: #{tpu_custom_call.1} parent=1 // pred_check
      _
    $region11: #{tpu_custom_call.1} parent=1 // pred_check_branch
      %30 = sbr.rel (0) target = $region13
    $region12: #{tpu_custom_call.1} parent=1 // pred_region
      %32 = vsyncadd [#allocation6], 0
      %s33 = sshll.u32 %s2, 4
      %s34 = int_to_ptr.hbm [resolvable:$true] %s33
      %s35 = sshll.u32 [#allocation5], 4
      %s36 = int_to_ptr.vmem [resolvable:$true] %s35
      %41 = dma.hbm_to_vmem [thread:$0]  %s34, 512, %s36, [#allocation6], 128, 128, 8
    $region13: #{tpu_custom_call.1} parent=1 // pred_fallthru
      _
    // Predicated region
    $region14: #{tpu_custom_call.1} parent=1 // pred_check
      _
    $region15: #{tpu_custom_call.1} parent=1 // pred_check_branch
      %43 = sbr.rel (0) target = $region17
    $region16: #{tpu_custom_call.1} parent=1 // pred_region
      _
    $region17: #{tpu_custom_call.1} parent=1 // pred_fallthru
      _
    // Predicated region
    $region18: #{tpu_custom_call.1} parent=1 // pred_check
      _
    $region19: #{tpu_custom_call.1} parent=1 // pred_check_branch
      %45 = sbr.rel (0) target = $region21
    $region20: #{tpu_custom_call.1} parent=1 // pred_region
      _
    $region21: #{tpu_custom_call.1} parent=1 // pred_fallthru
      _
    // Predicated region
    $region22: #{tpu_custom_call.1} parent=1 // pred_check
      _
    $region23: #{tpu_custom_call.1} parent=1 // pred_check_branch
      %47 = sbr.rel (0) target = $region25
    $region24: #{tpu_custom_call.1} parent=1 // pred_region
      _
    $region25: #{tpu_custom_call.1} parent=1 // pred_fallthru
      _
    // Predicated region
    $region26: #{tpu_custom_call.1} parent=1 // pred_check
      _
    $region27: #{tpu_custom_call.1} parent=1 // pred_check_branch
      %49 = sbr.rel (0) target = $region29
    $region28: #{tpu_custom_call.1} parent=1 // pred_region
      _
    $region29: #{tpu_custom_call.1} parent=1 // pred_fallthru
      _
    // Predicated region
    $region30: #{tpu_custom_call.1} parent=1 // pred_check
      _
    $region31: #{tpu_custom_call.1} parent=1 // pred_check_branch
      %51 = sbr.rel (0) target = $region33
    $region32: #{tpu_custom_call.1} parent=1 // pred_region
      _
    $region33: #{tpu_custom_call.1} parent=1 // pred_fallthru
      _
    // Predicated region
    $region34: #{tpu_custom_call.1} parent=1 // pred_check
      _
    $region35: #{tpu_custom_call.1} parent=1 // pred_check_branch
      %53 = sbr.rel (0) target = $region37
    $region36: #{tpu_custom_call.1} parent=1 // pred_region
      %55 = dma.done [#allocation3], 128
    $region37: #{tpu_custom_call.1} parent=1 // pred_fallthru
      _
    // Predicated region
    $region38: #{tpu_custom_call.1} parent=1 // pred_check
      _
    $region39: #{tpu_custom_call.1} parent=1 // pred_check_branch
      %57 = sbr.rel (0) target = $region41
    $region40: #{tpu_custom_call.1} parent=1 // pred_region
      %59 = dma.done [#allocation6], 512
    $region41: #{tpu_custom_call.1} parent=1 // pred_fallthru
      _
    %v60 = vld [vmem:[%s0] sm:$0xff]
    %v61 = vld [vmem:[#allocation2] sm:$0xff]
    %v62 = vmul.f32 %v60, %v61
    %v63 = vld [vmem:[#allocation5] sm:$0xff]
    %v64 = vld [vmem:[#allocation5 + $0x8] sm:$0xff]
    %v65 = vld [vmem:[#allocation5 + $0x10] sm:$0xff]
    %v66 = vld [vmem:[#allocation5 + $0x18] sm:$0xff]
    %v67 = vld [vmem:[%s3] sm:$0x1]
    %v69 = vperm.slane %v67, 0
    %vm71 = vcmask 261120
    %v73 = vsel %vm71, %v62, 0
    %75 = vmatpush.msra.mxu0 0.0
    %76 = vmatpush.msra.mxu0 0.0
    %77 = vmatpush.msra.mxu0 0.0
    %78 = vmatpush.msra.mxu0 0.0
    %79 = vmatpush.msra.mxu0 0.0
    %80 = vmatpush.msra.mxu0 0.0
    %81 = vmatpush.msra.mxu0 0.0
    %82 = vmatpush.msra.mxu0 0.0
    %83 = vmatpush.msra.mxu0 0.0
    %84 = vmatpush.msra.mxu0 0.0
    %85 = vmatpush.msra.mxu0 0.0
    %86 = vmatpush.msra.mxu0 0.0
    %87 = vmatpush.msra.mxu0 %v66
    %88 = vmatpush.msra.mxu0 %v65
    %89 = vmatpush.msra.mxu0 %v64
    %90 = vmatpush.msra.mxu0 %v63
    %91 = vmatmul.f32.gmra.mxu0 %v73
    %v92 = vpop.f32.mrf.mxu0
    %v93 = vadd.f32 %v69, %v92
    %94 = vdwg.mxu0
    %v95 = vmax.f32 %v93, 0.0
    %v96 = vld [vmem:[%s4] sm:$0xff]
    %v97 = vld [vmem:[%s4 + $0x8] sm:$0xff]
    %v98 = vld [vmem:[%s4 + $0x10] sm:$0xff]
    %v99 = vld [vmem:[%s4 + $0x18] sm:$0xff]
    %v100 = vld [vmem:[%s4 + $0x20] sm:$0xff]
    %v101 = vld [vmem:[%s4 + $0x28] sm:$0xff]
    %v102 = vld [vmem:[%s4 + $0x30] sm:$0xff]
    %v103 = vld [vmem:[%s4 + $0x38] sm:$0xff]
    %v104 = vld [vmem:[%s4 + $0x40] sm:$0xff]
    %v105 = vld [vmem:[%s4 + $0x48] sm:$0xff]
    %v106 = vld [vmem:[%s4 + $0x50] sm:$0xff]
    %v107 = vld [vmem:[%s4 + $0x58] sm:$0xff]
    %v108 = vld [vmem:[%s4 + $0x60] sm:$0xff]
    %v109 = vld [vmem:[%s4 + $0x68] sm:$0xff]
    %v110 = vld [vmem:[%s4 + $0x70] sm:$0xff]
    %v111 = vld [vmem:[%s4 + $0x78] sm:$0xff]
    %v112 = vld [vmem:[%s5] sm:$0x1]
    %v114 = vperm.slane %v112, 0
    %116 = vmatpush.msra.mxu0 %v111
    %117 = vmatpush.msra.mxu0 %v110
    %118 = vmatpush.msra.mxu0 %v109
    %119 = vmatpush.msra.mxu0 %v108
    %120 = vmatpush.msra.mxu0 %v107
    %121 = vmatpush.msra.mxu0 %v106
    %122 = vmatpush.msra.mxu0 %v105
    %123 = vmatpush.msra.mxu0 %v104
    %124 = vmatpush.msra.mxu0 %v103
    %125 = vmatpush.msra.mxu0 %v102
    %126 = vmatpush.msra.mxu0 %v101
    %127 = vmatpush.msra.mxu0 %v100
    %128 = vmatpush.msra.mxu0 %v99
    %129 = vmatpush.msra.mxu0 %v98
    %130 = vmatpush.msra.mxu0 %v97
    %131 = vmatpush.msra.mxu0 %v96
    %132 = vmatmul.f32.gmra.mxu0 %v95
    %v133 = vpop.f32.mrf.mxu0
    %v134 = vadd.f32 %v114, %v133
    %135 = vdwg.mxu0
    %v136 = vmax.f32 %v134, 0.0
    %v137 = vld [vmem:[%s6] sm:$0xff]
    %v138 = vld [vmem:[%s6 + $0x8] sm:$0xff]
    %v139 = vld [vmem:[%s6 + $0x10] sm:$0xff]
    %v140 = vld [vmem:[%s6 + $0x18] sm:$0xff]
    %v141 = vld [vmem:[%s6 + $0x20] sm:$0xff]
    %v142 = vld [vmem:[%s6 + $0x28] sm:$0xff]
    %v143 = vld [vmem:[%s6 + $0x30] sm:$0xff]
    %v144 = vld [vmem:[%s6 + $0x38] sm:$0xff]
    %v145 = vld [vmem:[%s6 + $0x40] sm:$0xff]
    %v146 = vld [vmem:[%s6 + $0x48] sm:$0xff]
    %v147 = vld [vmem:[%s6 + $0x50] sm:$0xff]
    %v148 = vld [vmem:[%s6 + $0x58] sm:$0xff]
    %v149 = vld [vmem:[%s6 + $0x60] sm:$0xff]
    %v150 = vld [vmem:[%s6 + $0x68] sm:$0xff]
    %v151 = vld [vmem:[%s6 + $0x70] sm:$0xff]
    %v152 = vld [vmem:[%s6 + $0x78] sm:$0xff]
    %v153 = vld [vmem:[%s7] sm:$0x1]
    %v155 = vperm.slane %v153, 0
    %157 = vmatpush.msra.mxu0 %v152
    %158 = vmatpush.msra.mxu0 %v151
    %159 = vmatpush.msra.mxu0 %v150
    %160 = vmatpush.msra.mxu0 %v149
    %161 = vmatpush.msra.mxu0 %v148
    %162 = vmatpush.msra.mxu0 %v147
    %163 = vmatpush.msra.mxu0 %v146
    %164 = vmatpush.msra.mxu0 %v145
    %165 = vmatpush.msra.mxu0 %v144
    %166 = vmatpush.msra.mxu0 %v143
    %167 = vmatpush.msra.mxu0 %v142
    %168 = vmatpush.msra.mxu0 %v141
    %169 = vmatpush.msra.mxu0 %v140
    %170 = vmatpush.msra.mxu0 %v139
    %171 = vmatpush.msra.mxu0 %v138
    %172 = vmatpush.msra.mxu0 %v137
    %173 = vmatmul.f32.gmra.mxu0 %v136
    %v174 = vpop.f32.mrf.mxu0
    %v175 = vadd.f32 %v155, %v174
    %176 = vdwg.mxu0
    %vm177 = vcmask 64512
    %178 = vst.msk [vmem:[#allocation7] sm:$0xff] %vm177, %v175
    // Predicated region
    $region42: #{tpu_custom_call.1} parent=1 // pred_check
      _
    $region43: #{tpu_custom_call.1} parent=1 // pred_check_branch
      %180 = sbr.rel (0) target = $region45
    $region44: #{tpu_custom_call.1} parent=1 // pred_region
      %182 = vsyncadd [#allocation4], 0
      %s184 = sshll.u32 [#allocation7], 4
      %s185 = int_to_ptr.vmem [resolvable:$true] %s184
      %s186 = sshll.u32 %s8, 4
      %s187 = int_to_ptr.hbm [resolvable:$true] %s186
      %189 = dma.vmem_to_hbm [thread:$0]  %s185, 128, %s187, [#allocation4]
    $region45: #{tpu_custom_call.1} parent=1 // pred_fallthru
      _
    // Predicated region
    $region46: #{tpu_custom_call.1} parent=1 // pred_check
      _
    $region47: #{tpu_custom_call.1} parent=1 // pred_check_branch
      %191 = sbr.rel (0) target = $region49
    $region48: #{tpu_custom_call.1} parent=1 // pred_region
      %193 = dma.done [#allocation4], 128
    $region49: #{tpu_custom_call.1} parent=1 // pred_fallthru
      _
    %194 = vsyncpa [#allocation3], 1
    %195 = vsyncpa [#allocation6], 1
    %196 = vsyncpa [#allocation4], 1

// kernel: tpu_custom_call.1
$region0: #{tpu_custom_call.1}
  #allocation0 [shape = 'u32[]', space=smem, size = 0x4, offset = 0x4, fixed_abs, tag = 'smem constant byte address 0x4 - core index']
  #allocation1 [shape = 'u32[72,128]{1,0:T(1,128)}', space=vmem, size = 0x9000, scoped, tag = 'internal scratch']
  %s0 = inlined_call_operand.vmem [shape: f32[8,32], index: 0, kind: input, shape index: {}]
  %s1 = inlined_call_operand.hbm [shape: f32[8,32], index: 1, kind: input, shape index: {}]
  %s2 = inlined_call_operand.hbm [shape: f32[32,128], index: 2, kind: input, shape index: {}]
  %s3 = inlined_call_operand.vmem [shape: f32[1,128], index: 3, kind: input, shape index: {}]
  %s4 = inlined_call_operand.vmem [shape: f32[128,128], index: 4, kind: input, shape index: {}]
  %s5 = inlined_call_operand.vmem [shape: f32[1,128], index: 5, kind: input, shape index: {}]
  %s6 = inlined_call_operand.vmem [shape: f32[128,8], index: 6, kind: input, shape index: {}]
  %s7 = inlined_call_operand.vmem [shape: f32[1,8], index: 7, kind: input, shape index: {}]
  %s8 = inlined_call_operand.hbm [shape: f32[8,8], index: 8, kind: output, shape index: {}]
  %s9 = sld [smem:[#allocation0]]
  $region50: #{tpu_custom_call.1} parent=0
    _
  %s11 = ssub.s32 1, %s9
  %s12 = scalar_select 0, %s11, %s9
  $region1: #{tpu_custom_call.1} parent=0
    #allocation2 [shape = 'u8[4096]{0}', space=vmem, size = 0x1000, scoped, tag = 'input window, operand 1, single buffered']
    #allocation3 [shape = 's32[1]{0}', space=sflag, size = 0x4, scoped, tag = 'scoped memory for tpu_custom_call.1']
    #allocation4 [shape = 's32[1]{0}', space=sflag, size = 0x4, scoped, tag = 'scoped memory for tpu_custom_call.1']
    #allocation5 [shape = 'u8[16384]{0}', space=vmem, size = 0x4000, scoped, tag = 'input window, operand 2, single buffered']
    #allocation6 [shape = 's32[1]{0}', space=sflag, size = 0x4, scoped, tag = 'scoped memory for tpu_custom_call.1']
    #allocation7 [shape = 'u8[4096]{0}', space=vmem, size = 0x1000, scoped, tag = 'output window, operand 0, single buffered']
    %13 = vsyncpa [#allocation3], 0
    %14 = vsyncpa [#allocation6], 0
    %15 = vsyncpa [#allocation4], 0
    // Predicated region
    $region2: #{tpu_custom_call.1} parent=1 // pred_check
      _
    $region3: #{tpu_custom_call.1} parent=1 // pred_check_branch
      %17 = sbr.rel (0) target = $region5
    $region4: #{tpu_custom_call.1} parent=1 // pred_region
      _
    $region5: #{tpu_custom_call.1} parent=1 // pred_fallthru
      _
    // Predicated region
    $region6: #{tpu_custom_call.1} parent=1 // pred_check
      _
    $region7: #{tpu_custom_call.1} parent=1 // pred_check_branch
      %19 = sbr.rel (0) target = $region9
    $region8: #{tpu_custom_call.1} parent=1 // pred_region
      %21 = vsyncadd [#allocation3], 0
      %s23 = sshll.u32 %s1, 4
      %s24 = int_to_ptr.hbm [resolvable:$true] %s23
      %s25 = sshll.u32 [#allocation2], 4
      %s26 = int_to_ptr.vmem [resolvable:$true] %s25
      %28 = dma.hbm_to_vmem [thread:$0]  %s24, 128, %s26, [#allocation3]
    $region9: #{tpu_custom_call.1} parent=1 // pred_fallthru
      _
    // Predicated region
    $region10: #{tpu_custom_call.1} parent=1 // pred_check
      _
    $region11: #{tpu_custom_call.1} parent=1 // pred_check_branch
      %30 = sbr.rel (0) target = $region13
    $region12: #{tpu_custom_call.1} parent=1 // pred_region
      %32 = vsyncadd [#allocation6], 0
      %s33 = sshll.u32 %s2, 4
      %s34 = int_to_ptr.hbm [resolvable:$true] %s33
      %s35 = sshll.u32 [#allocation5], 4
      %s36 = int_to_ptr.vmem [resolvable:$true] %s35
      %41 = dma.hbm_to_vmem [thread:$0]  %s34, 512, %s36, [#allocation6], 128, 128, 8
    $region13: #{tpu_custom_call.1} parent=1 // pred_fallthru
      _
    // Predicated region
    $region14: #{tpu_custom_call.1} parent=1 // pred_check
      _
    $region15: #{tpu_custom_call.1} parent=1 // pred_check_branch
      %43 = sbr.rel (0) target = $region17
    $region16: #{tpu_custom_call.1} parent=1 // pred_region
      _
    $region17: #{tpu_custom_call.1} parent=1 // pred_fallthru
      _
    // Predicated region
    $region18: #{tpu_custom_call.1} parent=1 // pred_check
      _
    $region19: #{tpu_custom_call.1} parent=1 // pred_check_branch
      %45 = sbr.rel (0) target = $region21
    $region20: #{tpu_custom_call.1} parent=1 // pred_region
      _
    $region21: #{tpu_custom_call.1} parent=1 // pred_fallthru
      _
    // Predicated region
    $region22: #{tpu_custom_call.1} parent=1 // pred_check
      _
    $region23: #{tpu_custom_call.1} parent=1 // pred_check_branch
      %47 = sbr.rel (0) target = $region25
    $region24: #{tpu_custom_call.1} parent=1 // pred_region
      _
    $region25: #{tpu_custom_call.1} parent=1 // pred_fallthru
      _
    // Predicated region
    $region26: #{tpu_custom_call.1} parent=1 // pred_check
      _
    $region27: #{tpu_custom_call.1} parent=1 // pred_check_branch
      %49 = sbr.rel (0) target = $region29
    $region28: #{tpu_custom_call.1} parent=1 // pred_region
      _
    $region29: #{tpu_custom_call.1} parent=1 // pred_fallthru
      _
    // Predicated region
    $region30: #{tpu_custom_call.1} parent=1 // pred_check
      _
    $region31: #{tpu_custom_call.1} parent=1 // pred_check_branch
      %51 = sbr.rel (0) target = $region33
    $region32: #{tpu_custom_call.1} parent=1 // pred_region
      _
    $region33: #{tpu_custom_call.1} parent=1 // pred_fallthru
      _
    // Predicated region
    $region34: #{tpu_custom_call.1} parent=1 // pred_check
      _
    $region35: #{tpu_custom_call.1} parent=1 // pred_check_branch
      %53 = sbr.rel (0) target = $region37
    $region36: #{tpu_custom_call.1} parent=1 // pred_region
      %55 = dma.done [#allocation3], 128
    $region37: #{tpu_custom_call.1} parent=1 // pred_fallthru
      _
    // Predicated region
    $region38: #{tpu_custom_call.1} parent=1 // pred_check
      _
    $region39: #{tpu_custom_call.1} parent=1 // pred_check_branch
      %57 = sbr.rel (0) target = $region41
    $region40: #{tpu_custom_call.1} parent=1 // pred_region
      %59 = dma.done [#allocation6], 512
    $region41: #{tpu_custom_call.1} parent=1 // pred_fallthru
      _
    %v60 = vld [vmem:[%s0] sm:$0xff]
    %v61 = vld [vmem:[#allocation2] sm:$0xff]
    %v62 = vmul.f32 %v60, %v61
    %v63 = vld [vmem:[#allocation5] sm:$0xff]
    %v64 = vld [vmem:[#allocation5 + $0x8] sm:$0xff]
    %v65 = vld [vmem:[#allocation5 + $0x10] sm:$0xff]
    %v66 = vld [vmem:[#allocation5 + $0x18] sm:$0xff]
    %v67 = vld [vmem:[%s3] sm:$0x1]
    %v69 = vperm.slane %v67, 0
    %vm71 = vcmask 261120
    %v73 = vsel %vm71, %v62, 0
    %75 = vmatpush.msra.mxu0 0.0
    %76 = vmatpush.msra.mxu0 0.0
    %77 = vmatpush.msra.mxu0 0.0
    %78 = vmatpush.msra.mxu0 0.0
    %79 = vmatpush.msra.mxu0 0.0
    %80 = vmatpush.msra.mxu0 0.0
    %81 = vmatpush.msra.mxu0 0.0
    %82 = vmatpush.msra.mxu0 0.0
    %83 = vmatpush.msra.mxu0 0.0
    %84 = vmatpush.msra.mxu0 0.0
    %85 = vmatpush.msra.mxu0 0.0
    %86 = vmatpush.msra.mxu0 0.0
    %87 = vmatpush.msra.mxu0 %v66
    %88 = vmatpush.msra.mxu0 %v65
    %89 = vmatpush.msra.mxu0 %v64
    %90 = vmatpush.msra.mxu0 %v63
    %91 = vmatmul.f32.gmra.mxu0 %v73
    %v92 = vpop.f32.mrf.mxu0
    %v93 = vadd.f32 %v69, %v92
    %94 = vdwg.mxu0
    %v95 = vmax.f32 %v93, 0.0
    %v96 = vld [vmem:[%s4] sm:$0xff]
    %v97 = vld [vmem:[%s4 + $0x8] sm:$0xff]
    %v98 = vld [vmem:[%s4 + $0x10] sm:$0xff]
    %v99 = vld [vmem:[%s4 + $0x18] sm:$0xff]
    %v100 = vld [vmem:[%s4 + $0x20] sm:$0xff]
    %v101 = vld [vmem:[%s4 + $0x28] sm:$0xff]
    %v102 = vld [vmem:[%s4 + $0x30] sm:$0xff]
    %v103 = vld [vmem:[%s4 + $0x38] sm:$0xff]
    %v104 = vld [vmem:[%s4 + $0x40] sm:$0xff]
    %v105 = vld [vmem:[%s4 + $0x48] sm:$0xff]
    %v106 = vld [vmem:[%s4 + $0x50] sm:$0xff]
    %v107 = vld [vmem:[%s4 + $0x58] sm:$0xff]
    %v108 = vld [vmem:[%s4 + $0x60] sm:$0xff]
    %v109 = vld [vmem:[%s4 + $0x68] sm:$0xff]
    %v110 = vld [vmem:[%s4 + $0x70] sm:$0xff]
    %v111 = vld [vmem:[%s4 + $0x78] sm:$0xff]
    %v112 = vld [vmem:[%s5] sm:$0x1]
    %v114 = vperm.slane %v112, 0
    %116 = vmatpush.msra.mxu0 %v111
    %117 = vmatpush.msra.mxu0 %v110
    %118 = vmatpush.msra.mxu0 %v109
    %119 = vmatpush.msra.mxu0 %v108
    %120 = vmatpush.msra.mxu0 %v107
    %121 = vmatpush.msra.mxu0 %v106
    %122 = vmatpush.msra.mxu0 %v105
    %123 = vmatpush.msra.mxu0 %v104
    %124 = vmatpush.msra.mxu0 %v103
    %125 = vmatpush.msra.mxu0 %v102
    %126 = vmatpush.msra.mxu0 %v101
    %127 = vmatpush.msra.mxu0 %v100
    %128 = vmatpush.msra.mxu0 %v99
    %129 = vmatpush.msra.mxu0 %v98
    %130 = vmatpush.msra.mxu0 %v97
    %131 = vmatpush.msra.mxu0 %v96
    %132 = vmatmul.f32.gmra.mxu0 %v95
    %v133 = vpop.f32.mrf.mxu0
    %v134 = vadd.f32 %v114, %v133
    %135 = vdwg.mxu0
    %v136 = vmax.f32 %v134, 0.0
    %v137 = vld [vmem:[%s6] sm:$0xff]
    %v138 = vld [vmem:[%s6 + $0x8] sm:$0xff]
    %v139 = vld [vmem:[%s6 + $0x10] sm:$0xff]
    %v140 = vld [vmem:[%s6 + $0x18] sm:$0xff]
    %v141 = vld [vmem:[%s6 + $0x20] sm:$0xff]
    %v142 = vld [vmem:[%s6 + $0x28] sm:$0xff]
    %v143 = vld [vmem:[%s6 + $0x30] sm:$0xff]
    %v144 = vld [vmem:[%s6 + $0x38] sm:$0xff]
    %v145 = vld [vmem:[%s6 + $0x40] sm:$0xff]
    %v146 = vld [vmem:[%s6 + $0x48] sm:$0xff]
    %v147 = vld [vmem:[%s6 + $0x50] sm:$0xff]
    %v148 = vld [vmem:[%s6 + $0x58] sm:$0xff]
    %v149 = vld [vmem:[%s6 + $0x60] sm:$0xff]
    %v150 = vld [vmem:[%s6 + $0x68] sm:$0xff]
    %v151 = vld [vmem:[%s6 + $0x70] sm:$0xff]
    %v152 = vld [vmem:[%s6 + $0x78] sm:$0xff]
    %v153 = vld [vmem:[%s7] sm:$0x1]
    %v155 = vperm.slane %v153, 0
    %157 = vmatpush.msra.mxu0 %v152
    %158 = vmatpush.msra.mxu0 %v151
    %159 = vmatpush.msra.mxu0 %v150
    %160 = vmatpush.msra.mxu0 %v149
    %161 = vmatpush.msra.mxu0 %v148
    %162 = vmatpush.msra.mxu0 %v147
    %163 = vmatpush.msra.mxu0 %v146
    %164 = vmatpush.msra.mxu0 %v145
    %165 = vmatpush.msra.mxu0 %v144
    %166 = vmatpush.msra.mxu0 %v143
    %167 = vmatpush.msra.mxu0 %v142
    %168 = vmatpush.msra.mxu0 %v141
    %169 = vmatpush.msra.mxu0 %v140
    %170 = vmatpush.msra.mxu0 %v139
    %171 = vmatpush.msra.mxu0 %v138
    %172 = vmatpush.msra.mxu0 %v137
    %173 = vmatmul.f32.gmra.mxu0 %v136
    %v174 = vpop.f32.mrf.mxu0
    %v175 = vadd.f32 %v155, %v174
    %176 = vdwg.mxu0
    %vm177 = vcmask 64512
    %178 = vst.msk [vmem:[#allocation7] sm:$0xff] %vm177, %v175
    // Predicated region
    $region42: #{tpu_custom_call.1} parent=1 // pred_check
      _
    $region43: #{tpu_custom_call.1} parent=1 // pred_check_branch
      %180 = sbr.rel (0) target = $region45
    $region44: #{tpu_custom_call.1} parent=1 // pred_region
      %182 = vsyncadd [#allocation4], 0
      %s184 = sshll.u32 [#allocation7], 4
      %s185 = int_to_ptr.vmem [resolvable:$true] %s184
      %s186 = sshll.u32 %s8, 4
      %s187 = int_to_ptr.hbm [resolvable:$true] %s186
      %189 = dma.vmem_to_hbm [thread:$0]  %s185, 128, %s187, [#allocation4]
    $region45: #{tpu_custom_call.1} parent=1 // pred_fallthru
      _
    // Predicated region
    $region46: #{tpu_custom_call.1} parent=1 // pred_check
      _
    $region47: #{tpu_custom_call.1} parent=1 // pred_check_branch
      %191 = sbr.rel (0) target = $region49
    $region48: #{tpu_custom_call.1} parent=1 // pred_region
      %193 = dma.done [#allocation4], 128
    $region49: #{tpu_custom_call.1} parent=1 // pred_fallthru
      _
    %194 = vsyncpa [#allocation3], 1
    %195 = vsyncpa [#allocation6], 1
    %196 = vsyncpa [#allocation4], 1

</llo_original>
